<compile_context>
chip_gen: v5e
topology: v5e:2x2
jax: 0.10.0
libtpu: 0.0.40
codegen_flags: <defaults>
</compile_context>

<pallas_src>
import math

import jax
import jax.numpy as jnp
from jax import lax
from jax.experimental import pallas as pl
from jax.experimental.pallas import tpu as pltpu


def _bilinear_sim_kernel(bias_ref, ones_ref, t1_ref, t2_ref, w_ref, out_ref, acc_ref):
    k = pl.program_id(1)

    @pl.when(k == 0)
    def _():
        acc_ref[...] = jnp.zeros_like(acc_ref)

    # Partial intermediate: acc += t1[:, k-chunk] @ W[k-chunk, :]  (MXU, f32 acc).
    acc_ref[...] += jnp.dot(t1_ref[...], w_ref[...], preferred_element_type=jnp.float32)

    @pl.when(k == pl.num_programs(1) - 1)
    def _():
        prod = acc_ref[...] * t2_ref[...]                      # (tm, d2), f32
        # Row-wise reduction landing lane-dense: ones(8, d2) contracted against
        # prod's last dim (NT matmul on the otherwise-idle MXU) -> (8, tm); every
        # row is identical, row 0 is the (1, tm) score row.
        s_rows = lax.dot_general(
            ones_ref[...], prod,
            dimension_numbers=(((1,), (1,)), ((), ())),
            preferred_element_type=jnp.float32)                # (8, tm)
        out_ref[...] = (s_rows[0:1, :] + bias_ref[0]).astype(out_ref.dtype)
        # TODO(synk): the module's optional `activation` is None in this config;
        # apply it to the (1, tm) row above if configured.


def _round_up(x, n):
    return ((x + n - 1) // n) * n


def _cdiv(a, b):
    return (a + b - 1) // b


def _vmem_capacity_bytes():
    try:
        return int(pltpu.get_tpu_info().vmem_capacity_bytes)
    except Exception:
        return 64 << 20  # conservative fallback: v7x per-TensorCore VMEM


def _kernel_vmem_bytes(tm, tk, d2, itemsize, w_bufs):
    t1_b = 2 * tm * tk * itemsize          # double-buffered tensor_1 row tile
    t2_b = 2 * tm * d2 * itemsize          # double-buffered tensor_2 row tile
    w_b = w_bufs * tk * d2 * itemsize      # weight panel (1 or 2 buffers)
    ones_b = 2 * 8 * d2 * 4                # reduction helper
    out_b = 2 * 1 * tm * itemsize          # (1, tm) score rows, double-buffered
    acc_b = tm * d2 * 4                    # f32 accumulator scratch
    tmp_b = 2 * tm * d2 * 4                # dot result + elementwise product temps
    return t1_b + t2_b + w_b + ones_b + out_b + acc_b + tmp_b


def _pick_tk(d1, d2, itemsize, budget):
    # Keep the whole contraction dim resident when the weight panel is small.
    if d1 <= 512 or 2 * d1 * d2 * itemsize <= budget // 3:
        return d1
    # Otherwise K-tile in MXU-friendly chunks (multiples of 256 preferred).
    for cand in (2048, 1024, 512, 256, 128):
        if d1 % cand == 0 and 2 * cand * d2 * itemsize <= budget // 2:
            return cand
    # TODO(synk): zero-pad d1 in the wrapper for huge d1 not divisible by 128.
    return d1


def bilinear_similarity(tensor_1, tensor_2, weight, bias, *,
                        target_step_bytes=4 << 20,
                        max_rows_per_step=None,
                        k_chunk=None):
    """tensor_1: [..., d1], tensor_2: [..., d2], weight: [d1, d2], bias: [1]."""
    batch_shape = tensor_1.shape[:-1]
    d1 = tensor_1.shape[-1]
    d2 = tensor_2.shape[-1]
    assert tensor_2.shape[:-1] == batch_shape
    assert weight.shape == (d1, d2)

    m = int(math.prod(batch_shape)) if batch_shape else 1
    t1 = tensor_1.reshape(m, d1)
    t2 = tensor_2.reshape(m, d2)

    # Pad only degenerate row counts (< one sublane). Everything else uses a
    # ragged trailing grid block; its garbage score lanes are sliced off below.
    m_rows = m
    if m_rows < 8:
        t1 = jnp.pad(t1, ((0, 8 - m_rows), (0, 0)))
        t2 = jnp.pad(t2, ((0, 8 - m_rows), (0, 0)))
        m_rows = 8

    itemsize = jnp.dtype(tensor_1.dtype).itemsize
    vmem_cap = _vmem_capacity_bytes()
    # Working-set budget: ~55% of VMEM (we set vmem_limit_bytes explicitly, so
    # the small default scoped limits on v5e/v6e are not the binding cap).
    budget = min(int(vmem_cap * 0.55), 96 << 20)

    # Contraction (d1) tiling.
    if (k_chunk is not None and d1 % k_chunk == 0
            and (k_chunk % 128 == 0 or k_chunk == d1)):
        tk = min(k_chunk, d1)
    else:
        tk = _pick_tk(d1, d2, itemsize, budget)
    num_k = _cdiv(d1, tk)

    # Weight buffering: single-buffer only when fully resident (constant
    # index_map -> never re-fetched) and large enough to matter.
    def _w_index_map(i, k):
        return (k, 0)

    w_bufs = 2
    if num_k == 1 and tk * d2 * itemsize > (1 << 20):
        try:
            w_spec = pl.BlockSpec((tk, d2), _w_index_map, pipeline_mode=pl.Buffered(1))
            w_bufs = 1
        except Exception:  # older API without pipeline_mode / Buffered
            w_spec = pl.BlockSpec((tk, d2), _w_index_map)
    else:
        w_spec = pl.BlockSpec((tk, d2), _w_index_map)

    # Row tile: sized so one step's fresh input DMA is ~target_step_bytes, then
    # clamped by the VMEM budget, then by the actual row count.
    row_bytes = (tk + d2) * itemsize
    tm = _round_up(max(1, target_step_bytes // row_bytes), 128)
    if max_rows_per_step is not None:
        tm = min(tm, _round_up(max_rows_per_step, 128))
    while tm > 128 and _kernel_vmem_bytes(tm, tk, d2, itemsize, w_bufs) > budget:
        tm -= 128
    if m_rows < tm:
        tm = max(8, (m_rows // 8) * 8)  # never let a block exceed the row count
    num_m = _cdiv(m_rows, tm)
    # TODO(synk): on v7x prefer num_m >= 2 (even) so the "parallel" axis shards
    # across both TensorCores, and bump t1/t2 to pl.Buffered(3) if the input DMA
    # is still exposed at 3.2 TB/s HBM.

    need = _kernel_vmem_bytes(tm, tk, d2, itemsize, w_bufs)
    vmem_limit = int(min(int(vmem_cap * 0.9),
                         max(need + need // 4 + (2 << 20), 32 << 20)))

    ones = jnp.ones((8, d2), jnp.float32)  # hoisted reduction helper (constant block)

    out = pl.pallas_call(
        _bilinear_sim_kernel,
        out_shape=jax.ShapeDtypeStruct((num_m, 1, tm), tensor_1.dtype),
        grid_spec=pltpu.PrefetchScalarGridSpec(
            num_scalar_prefetch=0,
            grid=(num_m, num_k),
            in_specs=[
                pl.BlockSpec(memory_space=pltpu.SMEM),           # bias (scalar)
                pl.BlockSpec((8, d2), lambda i, k: (0, 0)),      # ones (resident)
                pl.BlockSpec((tm, tk), lambda i, k: (i, k)),     # t1 row x K tile
                pl.BlockSpec((tm, d2), lambda i, k: (i, 0)),     # t2 row tile
                w_spec,                                          # weight panel
            ],
            # Lane-dense (1, tm) score row per row-tile.
            out_specs=pl.BlockSpec((None, 1, tm), lambda i, k: (i, 0, 0)),
            scratch_shapes=[pltpu.VMEM((tm, d2), jnp.float32)],  # f32 accumulator
        ),
        compiler_params=pltpu.CompilerParams(
            dimension_semantics=("parallel", "arbitrary"),
            vmem_limit_bytes=vmem_limit,
        ),
    )(bias, ones, t1, t2, weight)

    scores = out.reshape(num_m * tm)[:m]
    if batch_shape:
        return scores.reshape(batch_shape)
    # 1-D inputs: PyTorch broadcasting with bias of shape (1,) yields shape (1,).
    return scores


def init_params(key, d1, d2, dtype=jnp.float32):
    # xavier_uniform_: U(-a, a) with a = sqrt(6 / (fan_in + fan_out)); bias = 0.
    a = math.sqrt(6.0 / (d1 + d2))
    weight = jax.random.uniform(key, (d1, d2), dtype=dtype, minval=-a, maxval=a)
    bias = jnp.zeros((1,), dtype=dtype)
    return weight, bias


def _reference(tensor_1, tensor_2, weight, bias):
    return jnp.sum(jnp.matmul(tensor_1, weight) * tensor_2, axis=-1) + bias[0]


if __name__ == "__main__":
    key = jax.random.PRNGKey(0)
    keys = jax.random.split(key, 12)

    # Test 1: small shapes matching the module's typical use (batch=2, seq=8, hidden=32).
    batch, seq, d1, d2 = 2, 8, 32, 32
    weight, bias = init_params(keys[0], d1, d2)
    tensor_1 = jax.random.normal(keys[1], (batch, seq, d1), dtype=jnp.float32)
    tensor_2 = jax.random.normal(keys[2], (batch, seq, d2), dtype=jnp.float32)
    result = jax.block_until_ready(bilinear_similarity(tensor_1, tensor_2, weight, bias))
    ref = _reference(tensor_1, tensor_2, weight, bias)
    assert result.shape == (batch, seq)
    assert jnp.allclose(result, ref, atol=1e-4, rtol=1e-4)

    # Test 2: ragged M (not a multiple of 8/128), single tile, d1 != d2.
    b2, s2, e1, e2 = 3, 200, 32, 48
    weight2, bias2 = init_params(keys[3], e1, e2)
    a2 = jax.random.normal(keys[4], (b2, s2, e1), dtype=jnp.float32)
    c2 = jax.random.normal(keys[5], (b2, s2, e2), dtype=jnp.float32)
    result2 = jax.block_until_ready(bilinear_similarity(a2, c2, weight2, bias2))
    ref2 = _reference(a2, c2, weight2, bias2)
    assert result2.shape == (b2, s2)
    assert jnp.allclose(result2, ref2, atol=1e-4, rtol=1e-4)

    # Test 3: multi-tile grid with a ragged trailing block (no wrapper-side padding)
    # and a non-zero bias.
    b3, s3 = 3, 70                         # m = 210, tm forced to 128 -> 2 row tiles
    weight3, _ = init_params(keys[6], 32, 32)
    bias3 = jnp.full((1,), 0.5, jnp.float32)
    a3 = jax.random.normal(keys[7], (b3, s3, 32), dtype=jnp.float32)
    c3 = jax.random.normal(keys[8], (b3, s3, 32), dtype=jnp.float32)
    result3 = jax.block_until_ready(
        bilinear_similarity(a3, c3, weight3, bias3, max_rows_per_step=128))
    ref3 = _reference(a3, c3, weight3, bias3)
    assert result3.shape == (b3, s3)
    assert jnp.allclose(result3, ref3, atol=1e-4, rtol=1e-4)

    # Test 4: K-tiled contraction (d1 split across the trailing "arbitrary" axis).
    b4, s4, f1, f2 = 2, 40, 256, 64
    weight4, bias4 = init_params(keys[9], f1, f2)
    a4 = jax.random.normal(keys[10], (b4, s4, f1), dtype=jnp.float32)
    c4 = jax.random.normal(keys[11], (b4, s4, f2), dtype=jnp.float32)
    result4 = jax.block_until_ready(
        bilinear_similarity(a4, c4, weight4, bias4, k_chunk=128))
    ref4 = _reference(a4, c4, weight4, bias4)
    assert result4.shape == (b4, s4)
    assert jnp.allclose(result4, ref4, atol=1e-4, rtol=1e-4)

    print("KERNEL_OK")
</pallas_src>

<mosaic_0001>
module attributes {stable_mosaic.version = 11 : i64} {
  func.func @_bilinear_sim_kernel(%arg0: i32, %arg1: i32, %arg2: memref<1xf32, #tpu.memory_space<smem>>, %arg3: memref<8x32xf32, #tpu.memory_space<vmem>>, %arg4: memref<16x32xf32, #tpu.memory_space<vmem>>, %arg5: memref<16x32xf32, #tpu.memory_space<vmem>>, %arg6: memref<32x32xf32, #tpu.memory_space<vmem>>, %arg7: memref<1x1x16xf32, #tpu.memory_space<vmem>>, %arg8: memref<16x32xf32, #tpu.memory_space<vmem>>) attributes {dimension_semantics = [#tpu.dimension_semantics<parallel>, #tpu.dimension_semantics<arbitrary>], iteration_bounds = array<i64: 1, 1>, scalar_prefetch = 0 : i64, scratch_operands = 1 : i64, tpu.core_type = #tpu.core_type<tc>, window_params = [{transform_indices = @transform_0, window_bounds = array<i64: 1>}, {pipeline_mode = #tpu.pipeline_mode<synchronous>, transform_indices = @transform_1, window_bounds = array<i64: 8, 32>}, {transform_indices = @transform_2, window_bounds = array<i64: 16, 32>}, {transform_indices = @transform_3, window_bounds = array<i64: 16, 32>}, {transform_indices = @transform_4, window_bounds = array<i64: 32, 32>}, {transform_indices = @transform_5, window_bounds = array<i64: 1, 1, 16>}]} {
    %c0_i32 = arith.constant 0 : i32
    %0 = arith.cmpi eq, %arg1, %c0_i32 : i32
    %1 = arith.extui %0 : i1 to i32
    %c0_i32_0 = arith.constant 0 : i32
    %2 = arith.cmpi ne, %1, %c0_i32_0 : i32
    scf.if %2 {
      %cst_10 = arith.constant 0.000000e+00 : f32
      %12 = vector.broadcast %cst_10 : f32 to vector<16x32xf32>
      %c0_11 = arith.constant 0 : index
      %c0_12 = arith.constant 0 : index
      %13 = vector.load %arg8[%c0_11, %c0_12] : memref<16x32xf32, #tpu.memory_space<vmem>>, vector<16x32xf32>
      tpu.vector_store %arg8[%c0_11, %c0_12], %12 {strides = array<i32>} : memref<16x32xf32, #tpu.memory_space<vmem>>, vector<16x32xf32>,
    } else {
    }
    %c0 = arith.constant 0 : index
    %c0_1 = arith.constant 0 : index
    %3 = vector.load %arg8[%c0, %c0_1] : memref<16x32xf32, #tpu.memory_space<vmem>>, vector<16x32xf32>
    %c0_2 = arith.constant 0 : index
    %c0_3 = arith.constant 0 : index
    %4 = vector.load %arg4[%c0_2, %c0_3] : memref<16x32xf32, #tpu.memory_space<vmem>>, vector<16x32xf32>
    %c0_4 = arith.constant 0 : index
    %c0_5 = arith.constant 0 : index
    %5 = vector.load %arg6[%c0_4, %c0_5] : memref<32x32xf32, #tpu.memory_space<vmem>>, vector<32x32xf32>
    %cst = arith.constant dense<0.000000e+00> : vector<16x32xf32>
    %6 = tpu.matmul %4, %5, %cst {dimension_numbers = #tpu.dot_dimension_numbers<[1], [0], [0], [1], [0, 0, 1, 1], [], []>} : vector<16x32xf32>, vector<32x32xf32>, vector<16x32xf32> -> vector<16x32xf32>
    %7 = arith.addf %3, %6 : vector<16x32xf32>
    %c0_6 = arith.constant 0 : index
    %c0_7 = arith.constant 0 : index
    %8 = vector.load %arg8[%c0_6, %c0_7] : memref<16x32xf32, #tpu.memory_space<vmem>>, vector<16x32xf32>
    tpu.vector_store %arg8[%c0_6, %c0_7], %7 {strides = array<i32>} : memref<16x32xf32, #tpu.memory_space<vmem>>, vector<16x32xf32>,
    %c0_i32_8 = arith.constant 0 : i32
    %9 = arith.cmpi eq, %arg1, %c0_i32_8 : i32
    %10 = arith.extui %9 : i1 to i32
    %c0_i32_9 = arith.constant 0 : i32
    %11 = arith.cmpi ne, %10, %c0_i32_9 : i32
    scf.if %11 {
      %c0_10 = arith.constant 0 : index
      %c0_11 = arith.constant 0 : index
      %12 = vector.load %arg8[%c0_10, %c0_11] : memref<16x32xf32, #tpu.memory_space<vmem>>, vector<16x32xf32>
      %c0_12 = arith.constant 0 : index
      %c0_13 = arith.constant 0 : index
      %13 = vector.load %arg5[%c0_12, %c0_13] : memref<16x32xf32, #tpu.memory_space<vmem>>, vector<16x32xf32>
      %14 = arith.mulf %12, %13 : vector<16x32xf32>
      %c0_14 = arith.constant 0 : index
      %c0_15 = arith.constant 0 : index
      %15 = vector.load %arg3[%c0_14, %c0_15] : memref<8x32xf32, #tpu.memory_space<vmem>>, vector<8x32xf32>
      %cst_16 = arith.constant dense<0.000000e+00> : vector<8x16xf32>
      %16 = tpu.matmul %15, %14, %cst_16 {dimension_numbers = #tpu.dot_dimension_numbers<[1], [1], [0], [0], [0, 0, 1, 0], [], []>} : vector<8x32xf32>, vector<16x32xf32>, vector<8x16xf32> -> vector<8x16xf32>
      %17 = vector.extract_strided_slice %16 {offsets = [0, 0], sizes = [1, 16], strides = [1, 1]} : vector<8x16xf32> to vector<1x16xf32>
      %c0_17 = arith.constant 0 : index
      %18 = memref.load %arg2[%c0_17] : memref<1xf32, #tpu.memory_space<smem>>
      %19 = vector.broadcast %18 : f32 to vector<1x16xf32>
      %20 = arith.addf %17, %19 : vector<1x16xf32>
      %c0_18 = arith.constant 0 : index
      %c0_19 = arith.constant 0 : index
      %c0_20 = arith.constant 0 : index
      %21 = vector.load %arg7[%c0_18, %c0_19, %c0_20] : memref<1x1x16xf32, #tpu.memory_space<vmem>>, vector<1x1x16xf32>
      %22 = vector.shape_cast %21 : vector<1x1x16xf32> to vector<1x16xf32>
      %23 = vector.shape_cast %20 : vector<1x16xf32> to vector<1x1x16xf32>
      tpu.vector_store %arg7[%c0_18, %c0_19, %c0_20], %23 {strides = array<i32>} : memref<1x1x16xf32, #tpu.memory_space<vmem>>, vector<1x1x16xf32>,
    } else {
    }
    return
  }
  func.func @transform_0(%arg0: i32, %arg1: i32) -> i32 {
    %c0_i32 = arith.constant 0 : i32
    %c0_i32_0 = arith.constant 0 : i32
    return %c0_i32 : i32
  }
  func.func @transform_1(%arg0: i32, %arg1: i32) -> (i32, i32) {
    %c0_i32 = arith.constant 0 : i32
    %c0_i32_0 = arith.constant 0 : i32
    %c0_i32_1 = arith.constant 0 : i32
    return %c0_i32, %c0_i32_0 : i32, i32
  }
  func.func @transform_2(%arg0: i32, %arg1: i32) -> (i32, i32) {
    %c0_i32 = arith.constant 0 : i32
    return %arg0, %arg1 : i32, i32
  }
  func.func @transform_3(%arg0: i32, %arg1: i32) -> (i32, i32) {
    %c0_i32 = arith.constant 0 : i32
    %c0_i32_0 = arith.constant 0 : i32
    return %arg0, %c0_i32 : i32, i32
  }
  func.func @transform_4(%arg0: i32, %arg1: i32) -> (i32, i32) {
    %c0_i32 = arith.constant 0 : i32
    %c0_i32_0 = arith.constant 0 : i32
    return %arg1, %c0_i32 : i32, i32
  }
  func.func @transform_5(%arg0: i32, %arg1: i32) -> (i32, i32, i32) {
    %c0_i32 = arith.constant 0 : i32
    %c0_i32_0 = arith.constant 0 : i32
    %c0_i32_1 = arith.constant 0 : i32
    return %arg0, %c0_i32, %c0_i32_0 : i32, i32, i32
  }
}

</mosaic_0001>

<llo_original>
// kernel: tpu_custom_call.1
$region0: #{tpu_custom_call.1}
  #allocation0 [shape = 'u32[]', space=smem, size = 0x4, offset = 0x4, fixed_abs, tag = 'smem constant byte address 0x4 - core index']
  #allocation1 [shape = 'u32[72,128]{1,0:T(1,128)}', space=vmem, size = 0x9000, scoped, tag = 'internal scratch']
  #allocation2 [shape = 'f32[16,32]{1,0:T(8,128)}', space=vmem, size = 0x2000, scoped, tag = 'scratch operand']
  #allocation3 [shape = 'f32[1]{0:T(128)S(6)}', space=smem, size = 0x200, scoped, tag = 'scoped memory for tpu_custom_call.1']
  %s0 = inlined_call_operand.<no memory space> [shape: f32[1], index: 0, kind: input, shape index: {}]
  %s1 = inlined_call_operand.hbm [shape: f32[8,32], index: 1, kind: input, shape index: {}]
  %s2 = inlined_call_operand.hbm [shape: f32[16,32], index: 2, kind: input, shape index: {}]
  %s3 = inlined_call_operand.hbm [shape: f32[16,32], index: 3, kind: input, shape index: {}]
  %s4 = inlined_call_operand.hbm [shape: f32[32,32], index: 4, kind: input, shape index: {}]
  %s5 = inlined_call_operand.hbm [shape: f32[1,1,16], index: 5, kind: output, shape index: {}]
  %s6 = sld [smem:[#allocation0]]
  $region54: #{tpu_custom_call.1} parent=0
    _
  %s8 = ssub.s32 1, %s6
  %s9 = scalar_select 0, %s8, %s6
  %10 = sst [smem:[#allocation3]] %s0
  $region1: #{tpu_custom_call.1} parent=0
    #allocation4 [shape = 'u8[4096]{0}', space=vmem, size = 0x1000, scoped, tag = 'input window, operand 1, single buffered']
    #allocation5 [shape = 's32[1]{0}', space=sflag, size = 0x4, scoped, tag = 'scoped memory for tpu_custom_call.1']
    #allocation6 [shape = 's32[1]{0}', space=sflag, size = 0x4, scoped, tag = 'scoped memory for tpu_custom_call.1']
    #allocation7 [shape = 'u8[8192]{0}', space=vmem, size = 0x2000, scoped, tag = 'input window, operand 2, single buffered']
    #allocation8 [shape = 's32[1]{0}', space=sflag, size = 0x4, scoped, tag = 'scoped memory for tpu_custom_call.1']
    #allocation9 [shape = 'u8[8192]{0}', space=vmem, size = 0x2000, scoped, tag = 'input window, operand 3, single buffered']
    #allocation10 [shape = 'u8[16384]{0}', space=vmem, size = 0x4000, scoped, tag = 'input window, operand 4, single buffered']
    #allocation11 [shape = 's32[1]{0}', space=sflag, size = 0x4, scoped, tag = 'scoped memory for tpu_custom_call.1']
    #allocation12 [shape = 'u8[512]{0}', space=vmem, size = 0x400, scoped, tag = 'output window, operand 0, single buffered']
    %11 = vsyncpa [#allocation5], 0
    %12 = vsyncpa [#allocation8], 0
    %13 = vsyncpa [#allocation11], 0
    %14 = vsyncpa [#allocation6], 0
    // Predicated region
    $region2: #{tpu_custom_call.1} parent=1 // pred_check
      _
    $region3: #{tpu_custom_call.1} parent=1 // pred_check_branch
      %16 = sbr.rel (0) target = $region5
    $region4: #{tpu_custom_call.1} parent=1 // pred_region
      _
    $region5: #{tpu_custom_call.1} parent=1 // pred_fallthru
      _
    // Predicated region
    $region6: #{tpu_custom_call.1} parent=1 // pred_check
      _
    $region7: #{tpu_custom_call.1} parent=1 // pred_check_branch
      %18 = sbr.rel (0) target = $region9
    $region8: #{tpu_custom_call.1} parent=1 // pred_region
      %20 = vsyncadd [#allocation5], 0
      %s22 = sshll.u32 %s1, 4
      %s23 = int_to_ptr.hbm [resolvable:$true] %s22
      %s24 = sshll.u32 [#allocation4], 4
      %s25 = int_to_ptr.vmem [resolvable:$true] %s24
      %27 = dma.hbm_to_vmem [thread:$0]  %s23, 128, %s25, [#allocation5]
    $region9: #{tpu_custom_call.1} parent=1 // pred_fallthru
      _
    // Predicated region
    $region10: #{tpu_custom_call.1} parent=1 // pred_check
      _
    $region11: #{tpu_custom_call.1} parent=1 // pred_check_branch
      %29 = sbr.rel (0) target = $region13
    $region12: #{tpu_custom_call.1} parent=1 // pred_region
      %31 = vsyncadd [#allocation8], 0
      %s32 = sshll.u32 %s2, 4
      %s33 = int_to_ptr.hbm [resolvable:$true] %s32
      %s34 = sshll.u32 [#allocation7], 4
      %s35 = int_to_ptr.vmem [resolvable:$true] %s34
      %40 = dma.hbm_to_vmem [thread:$0]  %s33, 256, %s35, [#allocation8], 128, 128, 8
    $region13: #{tpu_custom_call.1} parent=1 // pred_fallthru
      _
    // Predicated region
    $region14: #{tpu_custom_call.1} parent=1 // pred_check
      _
    $region15: #{tpu_custom_call.1} parent=1 // pred_check_branch
      %42 = sbr.rel (0) target = $region17
    $region16: #{tpu_custom_call.1} parent=1 // pred_region
      %44 = vsyncadd [#allocation8], 0
      %s45 = sshll.u32 %s3, 4
      %s46 = int_to_ptr.hbm [resolvable:$true] %s45
      %s47 = sshll.u32 [#allocation9], 4
      %s48 = int_to_ptr.vmem [resolvable:$true] %s47
      %53 = dma.hbm_to_vmem [thread:$0]  %s46, 256, %s48, [#allocation8], 128, 128, 8
    $region17: #{tpu_custom_call.1} parent=1 // pred_fallthru
      _
    // Predicated region
    $region18: #{tpu_custom_call.1} parent=1 // pred_check
      _
    $region19: #{tpu_custom_call.1} parent=1 // pred_check_branch
      %55 = sbr.rel (0) target = $region21
    $region20: #{tpu_custom_call.1} parent=1 // pred_region
      %57 = vsyncadd [#allocation11], 0
      %s58 = sshll.u32 %s4, 4
      %s59 = int_to_ptr.hbm [resolvable:$true] %s58
      %s60 = sshll.u32 [#allocation10], 4
      %s61 = int_to_ptr.vmem [resolvable:$true] %s60
      %66 = dma.hbm_to_vmem [thread:$0]  %s59, 512, %s61, [#allocation11], 128, 128, 8
    $region21: #{tpu_custom_call.1} parent=1 // pred_fallthru
      _
    // Predicated region
    $region22: #{tpu_custom_call.1} parent=1 // pred_check
      _
    $region23: #{tpu_custom_call.1} parent=1 // pred_check_branch
      %68 = sbr.rel (0) target = $region25
    $region24: #{tpu_custom_call.1} parent=1 // pred_region
      %70 = dma.done [#allocation5], 128
    $region25: #{tpu_custom_call.1} parent=1 // pred_fallthru
      _
    // Predicated region
    $region26: #{tpu_custom_call.1} parent=1 // pred_check
      _
    $region27: #{tpu_custom_call.1} parent=1 // pred_check_branch
      %72 = sbr.rel (0) target = $region29
    $region28: #{tpu_custom_call.1} parent=1 // pred_region
      %74 = dma.done [#allocation8], 256
    $region29: #{tpu_custom_call.1} parent=1 // pred_fallthru
      _
    // Predicated region
    $region30: #{tpu_custom_call.1} parent=1 // pred_check
      _
    $region31: #{tpu_custom_call.1} parent=1 // pred_check_branch
      %76 = sbr.rel (0) target = $region33
    $region32: #{tpu_custom_call.1} parent=1 // pred_region
      %78 = dma.done [#allocation8], 256
    $region33: #{tpu_custom_call.1} parent=1 // pred_fallthru
      _
    // Predicated region
    $region34: #{tpu_custom_call.1} parent=1 // pred_check
      _
    $region35: #{tpu_custom_call.1} parent=1 // pred_check_branch
      %80 = sbr.rel (0) target = $region37
    $region36: #{tpu_custom_call.1} parent=1 // pred_region
      %82 = dma.done [#allocation11], 512
    $region37: #{tpu_custom_call.1} parent=1 // pred_fallthru
      _
    %p83 = scmp.eq.s32.totalorder 0, 0
    // Predicated region
    $region38: #{tpu_custom_call.1} parent=1 // pred_check
      %p84 = pneg %p83
    $region39: #{tpu_custom_call.1} parent=1 // pred_check_branch
      %86 = sbr.rel (%p84) target = $region41
    $region40: #{tpu_custom_call.1} parent=1 // pred_region
      %vm87 = vcmask 261120
      %88 = vst.msk [vmem:[#allocation2] sm:$0xff] %vm87, 0.0
      %89 = vst.msk [vmem:[#allocation2 + $0x8] sm:$0xff] %vm87, 0.0
    $region41: #{tpu_custom_call.1} parent=1 // pred_fallthru
      _
    %v90 = vld [vmem:[#allocation2] sm:$0xff]
    %v91 = vld [vmem:[#allocation2 + $0x8] sm:$0xff]
    %v92 = vld [vmem:[#allocation7] sm:$0xff]
    %v93 = vld [vmem:[#allocation7 + $0x8] sm:$0xff]
    %v94 = vld [vmem:[#allocation10] sm:$0xff]
    %v95 = vld [vmem:[#allocation10 + $0x8] sm:$0xff]
    %v96 = vld [vmem:[#allocation10 + $0x10] sm:$0xff]
    %v97 = vld [vmem:[#allocation10 + $0x18] sm:$0xff]
    %vm98 = vcmask 261120
    %v100 = vsel %vm98, %v92, 0
    %v103 = vsel %vm98, %v93, 0
    %105 = vmatpush.msra.mxu0 0.0
    %106 = vmatpush.msra.mxu0 0.0
    %107 = vmatpush.msra.mxu0 0.0
    %108 = vmatpush.msra.mxu0 0.0
    %109 = vmatpush.msra.mxu0 0.0
    %110 = vmatpush.msra.mxu0 0.0
    %111 = vmatpush.msra.mxu0 0.0
    %112 = vmatpush.msra.mxu0 0.0
    %113 = vmatpush.msra.mxu0 0.0
    %114 = vmatpush.msra.mxu0 0.0
    %115 = vmatpush.msra.mxu0 0.0
    %116 = vmatpush.msra.mxu0 0.0
    %117 = vmatpush.msra.mxu0 %v97
    %118 = vmatpush.msra.mxu0 %v96
    %119 = vmatpush.msra.mxu0 %v95
    %120 = vmatpush.msra.mxu0 %v94
    %121 = vmatmul.f32.gmra.mxu0 %v100
    %v122 = vpop.f32.mrf.mxu0
    %v123 = vadd.f32 0.0, %v122
    %124 = vmatmul.f32.gmra.mxu0 %v103
    %v125 = vpop.f32.mrf.mxu0
    %v126 = vadd.f32 0.0, %v125
    %127 = vdwg.mxu0
    %v128 = vadd.f32 %v90, %v123
    %v129 = vadd.f32 %v91, %v126
    %130 = vst.msk [vmem:[#allocation2] sm:$0xff] %vm98, %v128
    %131 = vst.msk [vmem:[#allocation2 + $0x8] sm:$0xff] %vm98, %v129
    // Predicated region
    $region42: #{tpu_custom_call.1} parent=1 // pred_check
      %p132 = pneg %p83
    $region43: #{tpu_custom_call.1} parent=1 // pred_check_branch
      %134 = sbr.rel (%p132) target = $region45
    $region44: #{tpu_custom_call.1} parent=1 // pred_region
      %v135 = vld [vmem:[#allocation2] sm:$0xff]
      %v136 = vld [vmem:[#allocation2 + $0x8] sm:$0xff]
      %v137 = vld [vmem:[#allocation9] sm:$0xff]
      %v138 = vld [vmem:[#allocation9 + $0x8] sm:$0xff]
      %v139 = vmul.f32 %v135, %v137
      %v140 = vmul.f32 %v136, %v138
      %v141 = vld [vmem:[#allocation4] sm:$0xff]
      %v143 = vsel %vm98, %v141, 0
      %v146 = vsel %vm98, %v139, 0
      %v149 = vsel %vm98, %v140, 0
      %151 = vmatpush.xpose.msra.mxu0 0.0
      %152 = vmatpush.xpose.msra.mxu0 0.0
      %153 = vmatpush.xpose.msra.mxu0 0.0
      %154 = vmatpush.xpose.msra.mxu0 0.0
      %155 = vmatpush.xpose.msra.mxu0 0.0
      %156 = vmatpush.xpose.msra.mxu0 0.0
      %157 = vmatpush.xpose.msra.mxu0 0.0
      %158 = vmatpush.xpose.msra.mxu0 0.0
      %159 = vmatpush.xpose.msra.mxu0 0.0
      %160 = vmatpush.xpose.msra.mxu0 0.0
      %161 = vmatpush.xpose.msra.mxu0 0.0
      %162 = vmatpush.xpose.msra.mxu0 0.0
      %163 = vmatpush.xpose.msra.mxu0 0.0
      %164 = vmatpush.xpose.msra.mxu0 0.0
      %165 = vmatpush.xpose.msra.mxu0 %v149
      %166 = vmatpush.xpose.msra.mxu0 %v146
      %167 = vmatmul.f32.gmra.mxu0 %v143
      %v168 = vpop.f32.mrf.mxu0
      %v169 = vadd.f32 0.0, %v168
      %170 = vdwg.mxu0
      %s171 = sld [smem:[#allocation3]]
      %v172 = vstv %s171
      %v173 = vadd.f32 %v169, %v172
      %vm174 = vcmask 122880
      %175 = vst.msk [vmem:[#allocation12] sm:$0x1] %vm174, %v173
    $region45: #{tpu_custom_call.1} parent=1 // pred_fallthru
      _
    // Predicated region
    $region46: #{tpu_custom_call.1} parent=1 // pred_check
      _
    $region47: #{tpu_custom_call.1} parent=1 // pred_check_branch
      %177 = sbr.rel (0) target = $region49
    $region48: #{tpu_custom_call.1} parent=1 // pred_region
      %179 = vsyncadd [#allocation6], 0
      %s181 = sshll.u32 [#allocation12], 4
      %s182 = int_to_ptr.vmem [resolvable:$true] %s181
      %s183 = sshll.u32 %s5, 4
      %s184 = int_to_ptr.hbm [resolvable:$true] %s183
      %186 = dma.vmem_to_hbm [thread:$0]  %s182, 16, %s184, [#allocation6]
    $region49: #{tpu_custom_call.1} parent=1 // pred_fallthru
      _
    // Predicated region
    $region50: #{tpu_custom_call.1} parent=1 // pred_check
      _
    $region51: #{tpu_custom_call.1} parent=1 // pred_check_branch
      %188 = sbr.rel (0) target = $region53
    $region52: #{tpu_custom_call.1} parent=1 // pred_region
      %190 = dma.done [#allocation6], 16
    $region53: #{tpu_custom_call.1} parent=1 // pred_fallthru
      _
    %191 = vsyncpa [#allocation5], 1
    %192 = vsyncpa [#allocation8], 1
    %193 = vsyncpa [#allocation11], 1
    %194 = vsyncpa [#allocation6], 1

</llo_original>
